<compile_context>
chip_gen: v7x
topology: tpu7x:2x2x1
jax: 0.10.0
libtpu: 0.0.40
codegen_flags: <defaults>
</compile_context>

<pallas_src>
import functools

import jax
import jax.numpy as jnp
from jax.experimental import pallas as pl
from jax.experimental.pallas import tpu as pltpu

H = 100        # logical hidden width of both hidden layers
HP = 128       # hidden width padded to a full lane-vreg
LANE = 128     # TPU lane width
K1 = 8         # padded contraction dim of the layer-1 matmul (f32 sublane tile)
ROW_H1_ONE = HP - 1   # h1 row that is a constant 1 (carries b2 into layer 2)
ROW_H2_ONE = HP - 2   # h2 row that is a constant 1 (carries b3 into layer 3)


def mlp_kernel(x_ref, w1_ref, w2_ref, w3_ref, o_ref):
    # Layout: features on sublanes, batch on lanes.
    #   x_ref : (K1, BL) f32  -- row 0 = x, row 1 = ones, rows 2..7 = 0
    #   w1_ref: (HP, K1) f32  -- [w1 | b1 | 0...], row 127 = [0,1,0...]
    #   w2_ref: (HP, HP) bf16 -- w2^T with b2 in column 127, row 126 = e_127
    #   w3_ref: (1, HP)  bf16 -- w3^T with b3 in lane 126
    #   o_ref : (1, BL)  f32

    # Layer 1 (bias folded): tiny-K f32 matmul on the MXU.
    h1 = jnp.dot(w1_ref[...], x_ref[...],
                 preferred_element_type=jnp.float32)          # (HP, BL)
    h1 = jnp.maximum(h1, 0.0).astype(jnp.bfloat16)            # ReLU (row 127 stays 1)

    # Layer 2 (b2 folded into column 127): 128x128 bf16 MXU matmul.
    h2 = jnp.dot(w2_ref[...], h1,
                 preferred_element_type=jnp.float32)          # (HP, BL)
    h2 = jnp.maximum(h2, 0.0).astype(jnp.bfloat16)            # ReLU (row 126 stays 1)

    # Layer 3 (b3 folded into lane 126): (1,HP)@(HP,BL) bf16 MXU matmul.
    out = jnp.dot(w3_ref[...], h2,
                  preferred_element_type=jnp.float32)         # (1, BL)
    o_ref[...] = out.astype(o_ref.dtype)


def _round_up(v, m):
    return ((v + m - 1) // m) * m


@functools.partial(jax.jit, static_argnames=("block_b",))
def neural_network_forward(x, params, *, block_b=4096):
    """x: (B, 1) float32 (PyTorch layout). Returns (B, 1) float32."""
    B = x.shape[0]

    # --- Augmented / padded parameters (built once in the wrapper). -------
    # Layer 1: columns [w1 | b1 | zeros]; row 127 -> constant-1 h1 row.
    w1aug = jnp.zeros((HP, K1), jnp.float32)
    w1aug = w1aug.at[:H, 0].set(params["w1"][0, :])
    w1aug = w1aug.at[:H, 1].set(params["b1"])
    w1aug = w1aug.at[ROW_H1_ONE, 1].set(1.0)

    # Layer 2: transposed (out, in) weights, b2 rides the constant-1 h1 row,
    # row 126 reproduces that constant 1 so b3 can be folded into layer 3.
    w2aug = jnp.zeros((HP, HP), jnp.float32)
    w2aug = w2aug.at[:H, :H].set(params["w2"].T)
    w2aug = w2aug.at[:H, ROW_H1_ONE].set(params["b2"])
    w2aug = w2aug.at[ROW_H2_ONE, ROW_H1_ONE].set(1.0)
    w2aug = w2aug.astype(jnp.bfloat16)

    # Layer 3: row vector with b3 riding the constant-1 h2 row.
    w3aug = jnp.zeros((1, HP), jnp.float32)
    w3aug = w3aug.at[0, :H].set(params["w3"][:, 0])
    w3aug = w3aug.at[0, ROW_H2_ONE].set(params["b3"][0])
    w3aug = w3aug.astype(jnp.bfloat16)

    # --- Batch tile: multiple of 128, <= 8192 (v7x 64 MiB VMEM cap), and
    #     <= ~half the padded batch so >= 2 grid steps exist for megacore. --
    bb = _round_up(max(int(block_b), LANE), LANE)
    bb = min(bb, 8192)
    b_ceil = _round_up(B, LANE)
    half = _round_up((b_ceil + 1) // 2, LANE)
    bl = max(LANE, min(bb, half))
    b_pad = _round_up(B, bl)

    # Batch on the lane axis; RHS carries [x ; ones ; zero padding].
    x2 = jnp.zeros((K1, b_pad), jnp.float32)
    x2 = x2.at[0, :B].set(x[:, 0])
    x2 = x2.at[1, :].set(1.0)

    const = lambda i: (0, 0)   # weights stay VMEM-resident across the grid

    out_t = pl.pallas_call(
        mlp_kernel,
        out_shape=jax.ShapeDtypeStruct((1, b_pad), jnp.float32),
        grid=(b_pad // bl,),
        in_specs=[
            pl.BlockSpec((K1, bl), lambda i: (0, i)),   # x tile (lane-dense)
            pl.BlockSpec((HP, K1), const),              # [w1 | b1]
            pl.BlockSpec((HP, HP), const),              # w2^T (+ b2), bf16
            pl.BlockSpec((1, HP), const),               # w3^T (+ b3), bf16
        ],
        out_specs=pl.BlockSpec((1, bl), lambda i: (0, i)),
        compiler_params=pltpu.CompilerParams(
            dimension_semantics=("parallel",),
            vmem_limit_bytes=48 * 1024 * 1024),
    )(x2, w1aug, w2aug, w3aug)

    return out_t[0, :B].reshape(B, 1)


def init_params(key):
    """PyTorch nn.Linear default init: U(-1/sqrt(fan_in), 1/sqrt(fan_in)).
    Weights stored in (in, out) layout, biases 1-D."""
    ks = jax.random.split(key, 6)

    def uniform(k, shape, fan_in):
        bound = 1.0 / jnp.sqrt(jnp.float32(fan_in))
        return jax.random.uniform(k, shape, jnp.float32, -bound, bound)

    return {
        "w1": uniform(ks[0], (1, H), 1),
        "b1": uniform(ks[1], (H,), 1),
        "w2": uniform(ks[2], (H, H), H),
        "b2": uniform(ks[3], (H,), H),
        "w3": uniform(ks[4], (H, 1), H),
        "b3": uniform(ks[5], (1,), H),
    }


def _reference(x, params):
    h = jnp.maximum(x @ params["w1"] + params["b1"], 0.0)
    h = jnp.maximum(h @ params["w2"] + params["b2"], 0.0)
    return h @ params["w3"] + params["b3"]


if __name__ == "__main__":
    key = jax.random.PRNGKey(0)
    k_params, k_x1, k_x2 = jax.random.split(key, 3)
    params = init_params(k_params)

    # Small batch (single grid step).
    B = 8
    x = jax.random.normal(k_x1, (B, 1), dtype=jnp.float32)
    out = jax.block_until_ready(neural_network_forward(x, params))
    ref = _reference(x, params)
    assert out.shape == (B, 1)
    assert jnp.allclose(out, ref, atol=2e-2, rtol=2e-2), "small-batch mismatch"

    # Ragged batch exercising multiple grid steps + tail padding.
    B2 = 260
    x2 = jax.random.normal(k_x2, (B2, 1), dtype=jnp.float32)
    out2 = jax.block_until_ready(
        neural_network_forward(x2, params, block_b=128))
    ref2 = _reference(x2, params)
    assert out2.shape == (B2, 1)
    assert jnp.allclose(out2, ref2, atol=2e-2, rtol=2e-2), "multi-tile mismatch"

    print("KERNEL_OK")
</pallas_src>

<mosaic_0001>
module attributes {stable_mosaic.version = 11 : i64} {
  func.func @mlp_kernel(%arg0: i32, %arg1: memref<8x128xf32, #tpu.memory_space<vmem>>, %arg2: memref<128x8xf32, #tpu.memory_space<vmem>>, %arg3: memref<128x128xbf16, #tpu.memory_space<vmem>>, %arg4: memref<1x128xbf16, #tpu.memory_space<vmem>>, %arg5: memref<1x128xf32, #tpu.memory_space<vmem>>) attributes {dimension_semantics = [#tpu.dimension_semantics<parallel>], iteration_bounds = array<i64: 1>, scalar_prefetch = 0 : i64, scratch_operands = 0 : i64, tpu.core_type = #tpu.core_type<tc>, window_params = [{transform_indices = @transform_0, window_bounds = array<i64: 8, 128>}, {pipeline_mode = #tpu.pipeline_mode<synchronous>, transform_indices = @transform_1, window_bounds = array<i64: 128, 8>}, {pipeline_mode = #tpu.pipeline_mode<synchronous>, transform_indices = @transform_2, window_bounds = array<i64: 128, 128>}, {pipeline_mode = #tpu.pipeline_mode<synchronous>, transform_indices = @transform_3, window_bounds = array<i64: 1, 128>}, {transform_indices = @transform_4, window_bounds = array<i64: 1, 128>}]} {
    %c0 = arith.constant 0 : index
    %c0_0 = arith.constant 0 : index
    %0 = vector.load %arg2[%c0, %c0_0] : memref<128x8xf32, #tpu.memory_space<vmem>>, vector<128x8xf32>
    %c0_1 = arith.constant 0 : index
    %c0_2 = arith.constant 0 : index
    %1 = vector.load %arg1[%c0_1, %c0_2] : memref<8x128xf32, #tpu.memory_space<vmem>>, vector<8x128xf32>
    %cst = arith.constant dense<0.000000e+00> : vector<128x128xf32>
    %2 = tpu.matmul %0, %1, %cst {dimension_numbers = #tpu.dot_dimension_numbers<[1], [0], [0], [1], [0, 0, 1, 1], [], []>} : vector<128x8xf32>, vector<8x128xf32>, vector<128x128xf32> -> vector<128x128xf32>
    %cst_3 = arith.constant 0.000000e+00 : f32
    %3 = vector.broadcast %cst_3 : f32 to vector<128x128xf32>
    %4 = arith.maximumf %2, %3 : vector<128x128xf32>
    %5 = arith.truncf %4 : vector<128x128xf32> to vector<128x128xbf16>
    %c0_4 = arith.constant 0 : index
    %c0_5 = arith.constant 0 : index
    %6 = vector.load %arg3[%c0_4, %c0_5] : memref<128x128xbf16, #tpu.memory_space<vmem>>, vector<128x128xbf16>
    %cst_6 = arith.constant dense<0.000000e+00> : vector<128x128xf32>
    %7 = tpu.matmul %6, %5, %cst_6 {dimension_numbers = #tpu.dot_dimension_numbers<[1], [0], [0], [1], [0, 0, 1, 1], [], []>} : vector<128x128xbf16>, vector<128x128xbf16>, vector<128x128xf32> -> vector<128x128xf32>
    %cst_7 = arith.constant 0.000000e+00 : f32
    %8 = vector.broadcast %cst_7 : f32 to vector<128x128xf32>
    %9 = arith.maximumf %7, %8 : vector<128x128xf32>
    %10 = arith.truncf %9 : vector<128x128xf32> to vector<128x128xbf16>
    %c0_8 = arith.constant 0 : index
    %c0_9 = arith.constant 0 : index
    %11 = vector.load %arg4[%c0_8, %c0_9] : memref<1x128xbf16, #tpu.memory_space<vmem>>, vector<1x128xbf16>
    %cst_10 = arith.constant dense<0.000000e+00> : vector<1x128xf32>
    %12 = tpu.matmul %11, %10, %cst_10 {dimension_numbers = #tpu.dot_dimension_numbers<[1], [0], [0], [1], [0, 0, 1, 1], [], []>} : vector<1x128xbf16>, vector<128x128xbf16>, vector<1x128xf32> -> vector<1x128xf32>
    %c0_11 = arith.constant 0 : index
    %c0_12 = arith.constant 0 : index
    %13 = vector.load %arg5[%c0_11, %c0_12] : memref<1x128xf32, #tpu.memory_space<vmem>>, vector<1x128xf32>
    tpu.vector_store %arg5[%c0_11, %c0_12], %12 {strides = array<i32>} : memref<1x128xf32, #tpu.memory_space<vmem>>, vector<1x128xf32>,
    return
  }
  func.func @transform_0(%arg0: i32) -> (i32, i32) {
    %c0_i32 = arith.constant 0 : i32
    %c0_i32_0 = arith.constant 0 : i32
    return %c0_i32, %arg0 : i32, i32
  }
  func.func @transform_1(%arg0: i32) -> (i32, i32) {
    %c0_i32 = arith.constant 0 : i32
    %c0_i32_0 = arith.constant 0 : i32
    %c0_i32_1 = arith.constant 0 : i32
    return %c0_i32, %c0_i32_0 : i32, i32
  }
  func.func @transform_2(%arg0: i32) -> (i32, i32) {
    %c0_i32 = arith.constant 0 : i32
    %c0_i32_0 = arith.constant 0 : i32
    %c0_i32_1 = arith.constant 0 : i32
    return %c0_i32, %c0_i32_0 : i32, i32
  }
  func.func @transform_3(%arg0: i32) -> (i32, i32) {
    %c0_i32 = arith.constant 0 : i32
    %c0_i32_0 = arith.constant 0 : i32
    %c0_i32_1 = arith.constant 0 : i32
    return %c0_i32, %c0_i32_0 : i32, i32
  }
  func.func @transform_4(%arg0: i32) -> (i32, i32) {
    %c0_i32 = arith.constant 0 : i32
    %c0_i32_0 = arith.constant 0 : i32
    return %c0_i32, %arg0 : i32, i32
  }
}

</mosaic_0001>

<llo_original>
// kernel: neural_network_forward.1
$region0: #{neural_network_forward.1}
  #allocation0 [shape = 'u32[]', space=smem, size = 0x4, offset = 0x4, fixed_abs, tag = 'smem constant byte address 0x4 - core index']
  #allocation1 [shape = 'u32[144,128]{1,0:T(1,128)}', space=vmem, size = 0x12000, scoped, tag = 'internal scratch']
  %s0 = inlined_call_operand.vmem [shape: f32[8,128], index: 0, kind: input, shape index: {}]
  %s1 = inlined_call_operand.vmem [shape: f32[128,8], index: 1, kind: input, shape index: {}]
  %s2 = inlined_call_operand.vmem [shape: bf16[128,128], index: 2, kind: input, shape index: {}]
  %s3 = inlined_call_operand.vmem [shape: bf16[1,128], index: 3, kind: input, shape index: {}]
  %s4 = inlined_call_operand.vmem [shape: f32[1,128], index: 4, kind: output, shape index: {}]
  %s5 = sld [smem:[#allocation0]]
  $region26: #{neural_network_forward.1} parent=0
    _
  %s7 = ssub.s32 1, %s5
  %s8 = scalar_select 0, %s7, %s5
  // Predicated region
  $region2: #{neural_network_forward.1} parent=0 // pred_check
    _
  $region3: #{neural_network_forward.1} parent=0 // pred_check_branch
    %10 = sbr.rel (0) target = $region5
  $region4: #{neural_network_forward.1} parent=0 // pred_region
    _
  $region5: #{neural_network_forward.1} parent=0 // pred_fallthru
    _
  // Predicated region
  $region6: #{neural_network_forward.1} parent=0 // pred_check
    _
  $region7: #{neural_network_forward.1} parent=0 // pred_check_branch
    %12 = sbr.rel (0) target = $region9
  $region8: #{neural_network_forward.1} parent=0 // pred_region
    _
  $region9: #{neural_network_forward.1} parent=0 // pred_fallthru
    _
  // Predicated region
  $region10: #{neural_network_forward.1} parent=0 // pred_check
    _
  $region11: #{neural_network_forward.1} parent=0 // pred_check_branch
    %14 = sbr.rel (0) target = $region13
  $region12: #{neural_network_forward.1} parent=0 // pred_region
    _
  $region13: #{neural_network_forward.1} parent=0 // pred_fallthru
    _
  // Predicated region
  $region14: #{neural_network_forward.1} parent=0 // pred_check
    _
  $region15: #{neural_network_forward.1} parent=0 // pred_check_branch
    %16 = sbr.rel (0) target = $region17
  $region16: #{neural_network_forward.1} parent=0 // pred_region
    _
  $region17: #{neural_network_forward.1} parent=0 // pred_fallthru
    _
  %v18 = vld [vmem:[%s1] sm:$0xff]
  %v19 = vld [vmem:[%s1 + $0x8] sm:$0xff]
  %v20 = vld [vmem:[%s1 + $0x10] sm:$0xff]
  %v21 = vld [vmem:[%s1 + $0x18] sm:$0xff]
  %v22 = vld [vmem:[%s1 + $0x20] sm:$0xff]
  %v23 = vld [vmem:[%s1 + $0x28] sm:$0xff]
  %v24 = vld [vmem:[%s1 + $0x30] sm:$0xff]
  %v25 = vld [vmem:[%s1 + $0x38] sm:$0xff]
  %v26 = vld [vmem:[%s1 + $0x40] sm:$0xff]
  %v27 = vld [vmem:[%s1 + $0x48] sm:$0xff]
  %v28 = vld [vmem:[%s1 + $0x50] sm:$0xff]
  %v29 = vld [vmem:[%s1 + $0x58] sm:$0xff]
  %v30 = vld [vmem:[%s1 + $0x60] sm:$0xff]
  %v31 = vld [vmem:[%s1 + $0x68] sm:$0xff]
  %v32 = vld [vmem:[%s1 + $0x70] sm:$0xff]
  %v33 = vld [vmem:[%s1 + $0x78] sm:$0xff]
  %v34 = vld [vmem:[%s0] sm:$0xff]
  %vm35 = vcmask 64512
  %v37 = vsel %vm35, %v18, 0
  %v40 = vsel %vm35, %v19, 0
  %v43 = vsel %vm35, %v20, 0
  %v46 = vsel %vm35, %v21, 0
  %v49 = vsel %vm35, %v22, 0
  %v52 = vsel %vm35, %v23, 0
  %v55 = vsel %vm35, %v24, 0
  %v58 = vsel %vm35, %v25, 0
  %v61 = vsel %vm35, %v26, 0
  %v64 = vsel %vm35, %v27, 0
  %v67 = vsel %vm35, %v28, 0
  %v70 = vsel %vm35, %v29, 0
  %v73 = vsel %vm35, %v30, 0
  %v76 = vsel %vm35, %v31, 0
  %v79 = vsel %vm35, %v32, 0
  %v82 = vsel %vm35, %v33, 0
  %84 = vmatprep.subr.mxu0 0.0
  %85 = vmatpush1.msra.mxu0 %v34
  %86 = vmatprep.subr.mxu0 0.0
  %87 = vmatpush1.msra.mxu0 0.0
  %88 = vmatprep.subr.mxu0 0.0
  %89 = vmatpush1.msra.mxu0 0.0
  %90 = vmatprep.subr.mxu0 0.0
  %91 = vmatpush1.msra.mxu0 0.0
  %92 = vmatprep.subr.mxu0 0.0
  %93 = vmatpush1.msra.mxu0 0.0
  %94 = vmatprep.subr.mxu0 0.0
  %95 = vmatpush1.msra.mxu0 0.0
  %96 = vmatprep.subr.mxu0 0.0
  %97 = vmatpush1.msra.mxu0 0.0
  %98 = vmatprep.subr.mxu0 0.0
  %99 = vmatpush1.msra.mxu0 0.0
  %100 = vmatprep.subr.mxu0 0.0
  %101 = vmatpush1.msra.mxu0 0.0
  %102 = vmatprep.subr.mxu0 0.0
  %103 = vmatpush1.msra.mxu0 0.0
  %104 = vmatprep.subr.mxu0 0.0
  %105 = vmatpush1.msra.mxu0 0.0
  %106 = vmatprep.subr.mxu0 0.0
  %107 = vmatpush1.msra.mxu0 0.0
  %108 = vmatprep.subr.mxu0 0.0
  %109 = vmatpush1.msra.mxu0 0.0
  %110 = vmatprep.subr.mxu0 0.0
  %111 = vmatpush1.msra.mxu0 0.0
  %112 = vmatprep.subr.mxu0 0.0
  %113 = vmatpush1.msra.mxu0 0.0
  %114 = vmatprep.subr.mxu0 0.0
  %115 = vmatpush1.msra.mxu0 0.0
  %116 = vmatprep.subr.mxu0 0.0
  %117 = vmatpush1.msra.mxu0 0.0
  %118 = vmatprep.subr.mxu0 0.0
  %119 = vmatpush1.msra.mxu0 0.0
  %120 = vmatprep.subr.mxu0 0.0
  %121 = vmatpush1.msra.mxu0 0.0
  %122 = vmatprep.subr.mxu0 0.0
  %123 = vmatpush1.msra.mxu0 0.0
  %124 = vmatprep.subr.mxu0 0.0
  %125 = vmatpush1.msra.mxu0 0.0
  %126 = vmatprep.subr.mxu0 0.0
  %127 = vmatpush1.msra.mxu0 0.0
  %128 = vmatprep.subr.mxu0 0.0
  %129 = vmatpush1.msra.mxu0 0.0
  %130 = vmatprep.subr.mxu0 0.0
  %131 = vmatpush1.msra.mxu0 0.0
  %132 = vmatprep.subr.mxu0 0.0
  %133 = vmatpush1.msra.mxu0 0.0
  %134 = vmatprep.subr.mxu0 0.0
  %135 = vmatpush1.msra.mxu0 0.0
  %136 = vmatprep.subr.mxu0 0.0
  %137 = vmatpush1.msra.mxu0 0.0
  %138 = vmatprep.subr.mxu0 0.0
  %139 = vmatpush1.msra.mxu0 0.0
  %140 = vmatprep.subr.mxu0 0.0
  %141 = vmatpush1.msra.mxu0 0.0
  %142 = vmatprep.subr.mxu0 0.0
  %143 = vmatpush1.msra.mxu0 0.0
  %144 = vmatprep.subr.mxu0 0.0
  %145 = vmatpush1.msra.mxu0 0.0
  %146 = vmatprep.subr.mxu0 0.0
  %147 = vmatpush1.msra.mxu0 0.0
  %148 = vmatprep.mubr.f32.mxu0 0.0
  %149 = vmatmul.mubr.f32.gmra.mrb[0].mxu0 %v37
  %v150 = vpop.f32.mrb[0].mxu0
  %v151 = vadd.f32 0.0, %v150
  %v152 = vpop.f32.mrb[0].mxu0
  %153 = vmatprep.mubr.f32.mxu0 0.0
  %154 = vmatmul.mubr.f32.gmra.mrb[0].mxu0 %v40
  %v155 = vpop.f32.mrb[0].mxu0
  %v156 = vadd.f32 0.0, %v155
  %v157 = vpop.f32.mrb[0].mxu0
  %158 = vmatprep.mubr.f32.mxu0 0.0
  %159 = vmatmul.mubr.f32.gmra.mrb[0].mxu0 %v43
  %v160 = vpop.f32.mrb[0].mxu0
  %v161 = vadd.f32 0.0, %v160
  %v162 = vpop.f32.mrb[0].mxu0
  %163 = vmatprep.mubr.f32.mxu0 0.0
  %164 = vmatmul.mubr.f32.gmra.mrb[0].mxu0 %v46
  %v165 = vpop.f32.mrb[0].mxu0
  %v166 = vadd.f32 0.0, %v165
  %v167 = vpop.f32.mrb[0].mxu0
  %168 = vmatprep.mubr.f32.mxu0 0.0
  %169 = vmatmul.mubr.f32.gmra.mrb[0].mxu0 %v49
  %v170 = vpop.f32.mrb[0].mxu0
  %v171 = vadd.f32 0.0, %v170
  %v172 = vpop.f32.mrb[0].mxu0
  %173 = vmatprep.mubr.f32.mxu0 0.0
  %174 = vmatmul.mubr.f32.gmra.mrb[0].mxu0 %v52
  %v175 = vpop.f32.mrb[0].mxu0
  %v176 = vadd.f32 0.0, %v175
  %v177 = vpop.f32.mrb[0].mxu0
  %178 = vmatprep.mubr.f32.mxu0 0.0
  %179 = vmatmul.mubr.f32.gmra.mrb[0].mxu0 %v55
  %v180 = vpop.f32.mrb[0].mxu0
  %v181 = vadd.f32 0.0, %v180
  %v182 = vpop.f32.mrb[0].mxu0
  %183 = vmatprep.mubr.f32.mxu0 0.0
  %184 = vmatmul.mubr.f32.gmra.mrb[0].mxu0 %v58
  %v185 = vpop.f32.mrb[0].mxu0
  %v186 = vadd.f32 0.0, %v185
  %v187 = vpop.f32.mrb[0].mxu0
  %188 = vmatprep.mubr.f32.mxu0 0.0
  %189 = vmatmul.mubr.f32.gmra.mrb[0].mxu0 %v61
  %v190 = vpop.f32.mrb[0].mxu0
  %v191 = vadd.f32 0.0, %v190
  %v192 = vpop.f32.mrb[0].mxu0
  %193 = vmatprep.mubr.f32.mxu0 0.0
  %194 = vmatmul.mubr.f32.gmra.mrb[0].mxu0 %v64
  %v195 = vpop.f32.mrb[0].mxu0
  %v196 = vadd.f32 0.0, %v195
  %v197 = vpop.f32.mrb[0].mxu0
  %198 = vmatprep.mubr.f32.mxu0 0.0
  %199 = vmatmul.mubr.f32.gmra.mrb[0].mxu0 %v67
  %v200 = vpop.f32.mrb[0].mxu0
  %v201 = vadd.f32 0.0, %v200
  %v202 = vpop.f32.mrb[0].mxu0
  %203 = vmatprep.mubr.f32.mxu0 0.0
  %204 = vmatmul.mubr.f32.gmra.mrb[0].mxu0 %v70
  %v205 = vpop.f32.mrb[0].mxu0
  %v206 = vadd.f32 0.0, %v205
  %v207 = vpop.f32.mrb[0].mxu0
  %208 = vmatprep.mubr.f32.mxu0 0.0
  %209 = vmatmul.mubr.f32.gmra.mrb[0].mxu0 %v73
  %v210 = vpop.f32.mrb[0].mxu0
  %v211 = vadd.f32 0.0, %v210
  %v212 = vpop.f32.mrb[0].mxu0
  %213 = vmatprep.mubr.f32.mxu0 0.0
  %214 = vmatmul.mubr.f32.gmra.mrb[0].mxu0 %v76
  %v215 = vpop.f32.mrb[0].mxu0
  %v216 = vadd.f32 0.0, %v215
  %v217 = vpop.f32.mrb[0].mxu0
  %218 = vmatprep.mubr.f32.mxu0 0.0
  %219 = vmatmul.mubr.f32.gmra.mrb[0].mxu0 %v79
  %v220 = vpop.f32.mrb[0].mxu0
  %v221 = vadd.f32 0.0, %v220
  %v222 = vpop.f32.mrb[0].mxu0
  %223 = vmatprep.mubr.f32.mxu0 0.0
  %224 = vmatmul.mubr.f32.gmra.mrb[0].mxu0 %v82
  %v225 = vpop.f32.mrb[0].mxu0
  %v226 = vadd.f32 0.0, %v225
  %v227 = vpop.f32.mrb[0].mxu0
  %228 = vdwg.mxu0
  %v229 = vmax.f32 %v151, 0.0
  %v230 = vmax.f32 %v156, 0.0
  %v231 = vmax.f32 %v161, 0.0
  %v232 = vmax.f32 %v166, 0.0
  %v233 = vmax.f32 %v171, 0.0
  %v234 = vmax.f32 %v176, 0.0
  %v235 = vmax.f32 %v181, 0.0
  %v236 = vmax.f32 %v186, 0.0
  %v237 = vmax.f32 %v191, 0.0
  %v238 = vmax.f32 %v196, 0.0
  %v239 = vmax.f32 %v201, 0.0
  %v240 = vmax.f32 %v206, 0.0
  %v241 = vmax.f32 %v211, 0.0
  %v242 = vmax.f32 %v216, 0.0
  %v243 = vmax.f32 %v221, 0.0
  %v244 = vmax.f32 %v226, 0.0
  %v245 = vpack.c.bf16 %v230, %v229
  %v246 = vpack.c.bf16 %v232, %v231
  %v247 = vpack.c.bf16 %v234, %v233
  %v248 = vpack.c.bf16 %v236, %v235
  %v249 = vpack.c.bf16 %v238, %v237
  %v250 = vpack.c.bf16 %v240, %v239
  %v251 = vpack.c.bf16 %v242, %v241
  %v252 = vpack.c.bf16 %v244, %v243
  %v253 = vld [vmem:[%s2] sm:$0xf]
  %v254 = vld [vmem:[%s2 + $0x4] sm:$0xf]
  %v255 = vld [vmem:[%s2 + $0x8] sm:$0xf]
  %v256 = vld [vmem:[%s2 + $0xc] sm:$0xf]
  %v257 = vld [vmem:[%s2 + $0x10] sm:$0xf]
  %v258 = vld [vmem:[%s2 + $0x14] sm:$0xf]
  %v259 = vld [vmem:[%s2 + $0x18] sm:$0xf]
  %v260 = vld [vmem:[%s2 + $0x1c] sm:$0xf]
  %v261 = vld [vmem:[%s2 + $0x20] sm:$0xf]
  %v262 = vld [vmem:[%s2 + $0x24] sm:$0xf]
  %v263 = vld [vmem:[%s2 + $0x28] sm:$0xf]
  %v264 = vld [vmem:[%s2 + $0x2c] sm:$0xf]
  %v265 = vld [vmem:[%s2 + $0x30] sm:$0xf]
  %v266 = vld [vmem:[%s2 + $0x34] sm:$0xf]
  %v267 = vld [vmem:[%s2 + $0x38] sm:$0xf]
  %v268 = vld [vmem:[%s2 + $0x3c] sm:$0xf]
  %v285 = vunpack.c.l.b16 %v253
  %v286 = vunpack.c.l.b16 %v254
  %v287 = vunpack.c.l.b16 %v255
  %v288 = vunpack.c.l.b16 %v256
  %v289 = vunpack.c.l.b16 %v257
  %v290 = vunpack.c.l.b16 %v258
  %v291 = vunpack.c.l.b16 %v259
  %v292 = vunpack.c.l.b16 %v260
  %v293 = vunpack.c.l.b16 %v261
  %v294 = vunpack.c.l.b16 %v262
  %v295 = vunpack.c.l.b16 %v263
  %v296 = vunpack.c.l.b16 %v264
  %v297 = vunpack.c.l.b16 %v265
  %v298 = vunpack.c.l.b16 %v266
  %v299 = vunpack.c.l.b16 %v267
  %v300 = vunpack.c.l.b16 %v268
  %v301 = vpack.c.b16 %v286, %v285
  %v302 = vpack.c.b16 %v288, %v287
  %v303 = vpack.c.b16 %v290, %v289
  %v304 = vpack.c.b16 %v292, %v291
  %v305 = vpack.c.b16 %v294, %v293
  %v306 = vpack.c.b16 %v296, %v295
  %v307 = vpack.c.b16 %v298, %v297
  %v308 = vpack.c.b16 %v300, %v299
  %317 = vmatprep.subr.bf16.mxu0 0
  %318 = vmatpush1.bf16.msra.mxu0 %v245
  %319 = vmatprep.subr.bf16.mxu0 0
  %320 = vmatpush1.bf16.msra.mxu0 %v246
  %321 = vmatprep.subr.bf16.mxu0 0
  %322 = vmatpush1.bf16.msra.mxu0 %v247
  %323 = vmatprep.subr.bf16.mxu0 0
  %324 = vmatpush1.bf16.msra.mxu0 %v248
  %325 = vmatprep.subr.bf16.mxu0 0
  %326 = vmatpush1.bf16.msra.mxu0 %v249
  %327 = vmatprep.subr.bf16.mxu0 0
  %328 = vmatpush1.bf16.msra.mxu0 %v250
  %329 = vmatprep.subr.bf16.mxu0 0
  %330 = vmatpush1.bf16.msra.mxu0 %v251
  %331 = vmatprep.subr.bf16.mxu0 0
  %332 = vmatpush1.bf16.msra.mxu0 %v252
  %333 = vmatprep.subr.bf16.mxu0 0
  %334 = vmatpush1.bf16.msra.mxu0 0
  %335 = vmatprep.subr.bf16.mxu0 0
  %336 = vmatpush1.bf16.msra.mxu0 0
  %337 = vmatprep.subr.bf16.mxu0 0
  %338 = vmatpush1.bf16.msra.mxu0 0
  %339 = vmatprep.subr.bf16.mxu0 0
  %340 = vmatpush1.bf16.msra.mxu0 0
  %341 = vmatprep.subr.bf16.mxu0 0
  %342 = vmatpush1.bf16.msra.mxu0 0
  %343 = vmatprep.subr.bf16.mxu0 0
  %344 = vmatpush1.bf16.msra.mxu0 0
  %345 = vmatprep.subr.bf16.mxu0 0
  %346 = vmatpush1.bf16.msra.mxu0 0
  %347 = vmatprep.subr.bf16.mxu0 0
  %348 = vmatpush1.bf16.msra.mxu0 0
  %349 = vmatprep.mubr.bf16.mxu0 0
  %350 = vmatmul.mubr.bf16.gmra.mrb[0].mxu0 %v301
  %v351 = vpop.f32.mrb[0].mxu0
  %v352 = vadd.f32 0.0, %v351
  %v353 = vpop.f32.mrb[0].mxu0
  %v354 = vpop.f32.mrb[0].mxu0
  %v355 = vadd.f32 0.0, %v354
  %v356 = vpop.f32.mrb[0].mxu0
  %357 = vmatprep.mubr.bf16.mxu0 0
  %358 = vmatmul.mubr.bf16.gmra.mrb[0].mxu0 %v302
  %v359 = vpop.f32.mrb[0].mxu0
  %v360 = vadd.f32 0.0, %v359
  %v361 = vpop.f32.mrb[0].mxu0
  %v362 = vpop.f32.mrb[0].mxu0
  %v363 = vadd.f32 0.0, %v362
  %v364 = vpop.f32.mrb[0].mxu0
  %365 = vmatprep.mubr.bf16.mxu0 0
  %366 = vmatmul.mubr.bf16.gmra.mrb[0].mxu0 %v303
  %v367 = vpop.f32.mrb[0].mxu0
  %v368 = vadd.f32 0.0, %v367
  %v369 = vpop.f32.mrb[0].mxu0
  %v370 = vpop.f32.mrb[0].mxu0
  %v371 = vadd.f32 0.0, %v370
  %v372 = vpop.f32.mrb[0].mxu0
  %373 = vmatprep.mubr.bf16.mxu0 0
  %374 = vmatmul.mubr.bf16.gmra.mrb[0].mxu0 %v304
  %v375 = vpop.f32.mrb[0].mxu0
  %v376 = vadd.f32 0.0, %v375
  %v377 = vpop.f32.mrb[0].mxu0
  %v378 = vpop.f32.mrb[0].mxu0
  %v379 = vadd.f32 0.0, %v378
  %v380 = vpop.f32.mrb[0].mxu0
  %381 = vmatprep.mubr.bf16.mxu0 0
  %382 = vmatmul.mubr.bf16.gmra.mrb[0].mxu0 %v305
  %v383 = vpop.f32.mrb[0].mxu0
  %v384 = vadd.f32 0.0, %v383
  %v385 = vpop.f32.mrb[0].mxu0
  %v386 = vpop.f32.mrb[0].mxu0
  %v387 = vadd.f32 0.0, %v386
  %v388 = vpop.f32.mrb[0].mxu0
  %389 = vmatprep.mubr.bf16.mxu0 0
  %390 = vmatmul.mubr.bf16.gmra.mrb[0].mxu0 %v306
  %v391 = vpop.f32.mrb[0].mxu0
  %v392 = vadd.f32 0.0, %v391
  %v393 = vpop.f32.mrb[0].mxu0
  %v394 = vpop.f32.mrb[0].mxu0
  %v395 = vadd.f32 0.0, %v394
  %v396 = vpop.f32.mrb[0].mxu0
  %397 = vmatprep.mubr.bf16.mxu0 0
  %398 = vmatmul.mubr.bf16.gmra.mrb[0].mxu0 %v307
  %v399 = vpop.f32.mrb[0].mxu0
  %v400 = vadd.f32 0.0, %v399
  %v401 = vpop.f32.mrb[0].mxu0
  %v402 = vpop.f32.mrb[0].mxu0
  %v403 = vadd.f32 0.0, %v402
  %v404 = vpop.f32.mrb[0].mxu0
  %405 = vmatprep.mubr.bf16.mxu0 0
  %406 = vmatmul.mubr.bf16.gmra.mrb[0].mxu0 %v308
  %v407 = vpop.f32.mrb[0].mxu0
  %v408 = vadd.f32 0.0, %v407
  %v409 = vpop.f32.mrb[0].mxu0
  %v410 = vpop.f32.mrb[0].mxu0
  %v411 = vadd.f32 0.0, %v410
  %v412 = vpop.f32.mrb[0].mxu0
  %413 = vdwg.mxu0
  %v414 = vmax.f32 %v352, 0.0
  %v415 = vmax.f32 %v355, 0.0
  %v416 = vmax.f32 %v360, 0.0
  %v417 = vmax.f32 %v363, 0.0
  %v418 = vmax.f32 %v368, 0.0
  %v419 = vmax.f32 %v371, 0.0
  %v420 = vmax.f32 %v376, 0.0
  %v421 = vmax.f32 %v379, 0.0
  %v422 = vmax.f32 %v384, 0.0
  %v423 = vmax.f32 %v387, 0.0
  %v424 = vmax.f32 %v392, 0.0
  %v425 = vmax.f32 %v395, 0.0
  %v426 = vmax.f32 %v400, 0.0
  %v427 = vmax.f32 %v403, 0.0
  %v428 = vmax.f32 %v408, 0.0
  %v429 = vmax.f32 %v411, 0.0
  %v430 = vpack.c.bf16 %v415, %v414
  %v431 = vpack.c.bf16 %v417, %v416
  %v432 = vpack.c.bf16 %v419, %v418
  %v433 = vpack.c.bf16 %v421, %v420
  %v434 = vpack.c.bf16 %v423, %v422
  %v435 = vpack.c.bf16 %v425, %v424
  %v436 = vpack.c.bf16 %v427, %v426
  %v437 = vpack.c.bf16 %v429, %v428
  %v438 = vld [vmem:[%s3] sm:$0x1]
  %439 = vmatprep.subr.bf16.mxu0 0
  %440 = vmatpush1.bf16.msra.mxu0 %v430
  %441 = vmatprep.subr.bf16.mxu0 0
  %442 = vmatpush1.bf16.msra.mxu0 %v431
  %443 = vmatprep.subr.bf16.mxu0 0
  %444 = vmatpush1.bf16.msra.mxu0 %v432
  %445 = vmatprep.subr.bf16.mxu0 0
  %446 = vmatpush1.bf16.msra.mxu0 %v433
  %447 = vmatprep.subr.bf16.mxu0 0
  %448 = vmatpush1.bf16.msra.mxu0 %v434
  %449 = vmatprep.subr.bf16.mxu0 0
  %450 = vmatpush1.bf16.msra.mxu0 %v435
  %451 = vmatprep.subr.bf16.mxu0 0
  %452 = vmatpush1.bf16.msra.mxu0 %v436
  %453 = vmatprep.subr.bf16.mxu0 0
  %454 = vmatpush1.bf16.msra.mxu0 %v437
  %455 = vmatprep.subr.bf16.mxu0 0
  %456 = vmatpush1.bf16.msra.mxu0 0
  %457 = vmatprep.subr.bf16.mxu0 0
  %458 = vmatpush1.bf16.msra.mxu0 0
  %459 = vmatprep.subr.bf16.mxu0 0
  %460 = vmatpush1.bf16.msra.mxu0 0
  %461 = vmatprep.subr.bf16.mxu0 0
  %462 = vmatpush1.bf16.msra.mxu0 0
  %463 = vmatprep.subr.bf16.mxu0 0
  %464 = vmatpush1.bf16.msra.mxu0 0
  %465 = vmatprep.subr.bf16.mxu0 0
  %466 = vmatpush1.bf16.msra.mxu0 0
  %467 = vmatprep.subr.bf16.mxu0 0
  %468 = vmatpush1.bf16.msra.mxu0 0
  %469 = vmatprep.subr.bf16.mxu0 0
  %470 = vmatpush1.bf16.msra.mxu0 0
  %471 = vmatprep.mubr.bf16.mxu0 0
  %472 = vmatmul.mubr.bf16.gmra.mrb[0].mxu0 %v438
  %v473 = vpop.f32.mrb[0].mxu0
  %v474 = vadd.f32 0.0, %v473
  %v475 = vpop.f32.mrb[0].mxu0
  %v476 = vpop.f32.mrb[0].mxu0
  %v477 = vpop.f32.mrb[0].mxu0
  %478 = vdwg.mxu0
  %479 = vst [vmem:[%s4] sm:$0x1] %v474
  // Predicated region
  $region18: #{neural_network_forward.1} parent=0 // pred_check
    _
  $region19: #{neural_network_forward.1} parent=0 // pred_check_branch
    %481 = sbr.rel (0) target = $region21
  $region20: #{neural_network_forward.1} parent=0 // pred_region
    _
  $region21: #{neural_network_forward.1} parent=0 // pred_fallthru
    _
  // Predicated region
  $region22: #{neural_network_forward.1} parent=0 // pred_check
    _
  $region23: #{neural_network_forward.1} parent=0 // pred_check_branch
    %483 = sbr.rel (0) target = $region25
  $region24: #{neural_network_forward.1} parent=0 // pred_region
    _
  $region25: #{neural_network_forward.1} parent=0 // pred_fallthru
    _

</llo_original>
